<compile_context>
chip_gen: v6e
topology: v6e:2x2x1
jax: 0.10.0
libtpu: 0.0.40
codegen_flags: <defaults>
</compile_context>

<pallas_src>
import math

import jax
import jax.numpy as jnp
from jax.experimental import pallas as pl
from jax.experimental.pallas import tpu as pltpu


def _round_up(x, m):
    return ((x + m - 1) // m) * m


def _const_spec(shape, index_map):
    # Grid-invariant operand: request a single pipeline buffer (the default
    # double buffer is pure VMEM waste for a constant index_map). Fall back to
    # the default spec if this JAX build does not expose pipeline_mode.
    try:
        return pl.BlockSpec(shape, index_map, pipeline_mode=pl.Buffered(1))
    except (TypeError, AttributeError):
        return pl.BlockSpec(shape, index_map)


# ---------------------------------------------------------------------------
# Pallas kernel 1: [Mp,K]@[K,Np] (bf16 in, fp32 MXU accumulate, bf16 out) plus
# fused per-channel sum / sum-of-squares accumulators for BatchNorm batch
# stats.  No bias (cancels under train-mode BN), so zero-padded M rows
# contribute exactly zero to the stats -> no masking needed on any tile.
# Stats are kept sublane-preserving (8, Np): only VPU adds per step.
# ---------------------------------------------------------------------------
def _mm_stats_kernel(a_ref, w_ref, o_ref, sum_ref, sq_ref):
    i = pl.program_id(1)          # M-tile axis ("arbitrary")

    @pl.when(i == 0)
    def _():
        sum_ref[...] = jnp.zeros_like(sum_ref)
        sq_ref[...] = jnp.zeros_like(sq_ref)

    # bf16 operands -> fp32 accumulate on the MXU; lane-dense Np store in bf16.
    y = jnp.dot(a_ref[...], w_ref[...], preferred_element_type=jnp.float32)
    o_ref[...] = y.astype(o_ref.dtype)

    # (tm, Np) -> (tm/8, 8, Np): the leading-axis sum is pure elementwise VPU
    # adds across vregs (no per-step cross-sublane XLU reduce).
    tm, npad = y.shape
    y3 = y.reshape(tm // 8, 8, npad)
    sum_ref[...] += jnp.sum(y3, axis=0)
    sq_ref[...] += jnp.sum(y3 * y3, axis=0)


def matmul_stats(cols_bf16, w_bf16, *, tm, vmem_limit_bytes):
    Mp, K = cols_bf16.shape
    K2, Np = w_bf16.shape
    assert K == K2 and Np % 128 == 0 and tm % 8 == 0 and Mp % (2 * tm) == 0
    nhalf = Mp // tm // 2          # M tiles per core half

    pre, csum, csq = pl.pallas_call(
        _mm_stats_kernel,
        out_shape=(
            jax.ShapeDtypeStruct((Mp, Np), jnp.bfloat16),   # pre (bf16 stream)
            jax.ShapeDtypeStruct((2 * 8, Np), jnp.float32),  # per-core sum rows
            jax.ShapeDtypeStruct((2 * 8, Np), jnp.float32),  # per-core sumsq rows
        ),
        grid_spec=pltpu.PrefetchScalarGridSpec(
            num_scalar_prefetch=0,
            # Leading size-2 axis: split across v7x's two TensorCores
            # ("parallel"); plain serial outer loop on single-TC v5e/v6e.
            grid=(2, nhalf),
            in_specs=[
                pl.BlockSpec((tm, K), lambda c, i: (c * nhalf + i, 0)),
                _const_spec((K, Np), lambda c, i: (0, 0)),   # invariant weight
            ],
            out_specs=(
                pl.BlockSpec((tm, Np), lambda c, i: (c * nhalf + i, 0)),
                pl.BlockSpec((8, Np), lambda c, i: (c, 0)),  # resident per-core acc
                pl.BlockSpec((8, Np), lambda c, i: (c, 0)),  # resident per-core acc
            ),
        ),
        compiler_params=pltpu.CompilerParams(
            dimension_semantics=("parallel", "arbitrary"),
            vmem_limit_bytes=vmem_limit_bytes,
        ),
    )(cols_bf16, w_bf16)
    return pre, csum, csq


# ---------------------------------------------------------------------------
# Pallas kernel 2: fused affine BatchNorm (precomputed scale/shift) + ReLU.
# bf16 input stream, fp32 compute/output; lane-dense Np (multiple of 128).
# ---------------------------------------------------------------------------
def _bn_relu_kernel(x_ref, s_ref, t_ref, o_ref):
    x = x_ref[...].astype(jnp.float32)
    o_ref[...] = jnp.maximum(x * s_ref[...] + t_ref[...], 0.0)


def bn_relu(pre_bf16, scale, shift, *, tm):
    Mp, Np = pre_bf16.shape
    assert Mp % tm == 0 and Np % 128 == 0
    return pl.pallas_call(
        _bn_relu_kernel,
        out_shape=jax.ShapeDtypeStruct((Mp, Np), jnp.float32),
        grid_spec=pltpu.PrefetchScalarGridSpec(
            num_scalar_prefetch=0,
            grid=(Mp // tm,),
            in_specs=[
                pl.BlockSpec((tm, Np), lambda i: (i, 0)),
                _const_spec((1, Np), lambda i: (0, 0)),
                _const_spec((1, Np), lambda i: (0, 0)),
            ],
            out_specs=pl.BlockSpec((tm, Np), lambda i: (i, 0)),
        ),
        compiler_params=pltpu.CompilerParams(dimension_semantics=("parallel",)),
    )(pre_bf16, scale.reshape(1, Np), shift.reshape(1, Np))


# ---------------------------------------------------------------------------
# Tiling / VMEM planning
# ---------------------------------------------------------------------------
def _plan_matmul_tiling(M, K, Np):
    def need_bytes(tm):
        return (2 * tm * K * 2        # lhs bf16, double buffered
                + K * Np * 2          # weight bf16, single buffer
                + 2 * tm * Np * 2     # bf16 out, double buffered
                + 2 * 2 * 8 * Np * 4)  # resident stat accumulator blocks

    budget = 12 << 20                 # fits v5e's 16 MiB default scoped VMEM
    tm, mp = 8, _round_up(M, 16)
    for cand in (512, 256, 128, 64, 32, 16, 8):
        cand_mp = _round_up(M, 2 * cand)       # 2-way core split needs even tiles
        if cand_mp - M > max(M // 8, 8):       # cap full-copy jnp.pad waste
            continue
        if need_bytes(cand) > budget and cand > 8:
            continue
        tm, mp = cand, cand_mp
        break
    vmem_limit = min(64 << 20, max(32 << 20, 2 * need_bytes(tm) + (4 << 20)))
    return tm, mp, vmem_limit


def _plan_bn_tiling(Mp, Np, tm):
    budget = 8 << 20
    # Pure streaming pass: grow the row block to amortize per-step overhead...
    while Mp % (2 * tm) == 0 and tm < 2048 and 2 * tm * Np * 12 <= budget:
        tm *= 2
    # ...but shrink it if a single block blows the budget at large Np.
    while tm > 8 and tm % 2 == 0 and tm * Np * 12 > budget:
        tm //= 2
    return tm


# ---------------------------------------------------------------------------
# JAX glue: params, offset/mask conv, bilinear deformable sampling
# ---------------------------------------------------------------------------
def init_params(key, in_channels, out_channels):
    # matches DeformConv.__init__ / reset_parameters
    stdv = 1.0 / math.sqrt(in_channels * 3 * 3)
    weight = jax.random.uniform(
        key, (out_channels, in_channels, 3, 3), jnp.float32, -stdv, stdv
    )
    return dict(
        weight=weight,                                          # main deform-conv weight
        bias=jnp.zeros((out_channels,), jnp.float32),           # zeroed in reset_parameters
        w_off=jnp.zeros((27, in_channels, 3, 3), jnp.float32),  # conv_offset_mask weight (zero-init)
        b_off=jnp.zeros((27,), jnp.float32),                    # conv_offset_mask bias (zero-init)
        gamma=jnp.ones((out_channels,), jnp.float32),           # BatchNorm weight
        beta=jnp.zeros((out_channels,), jnp.float32),           # BatchNorm bias
    )


def _gather_bilinear_modulated(x_nhwc, py, px, mask):
    """Bilinear sample x_nhwc[B,H,W,C] at fractional locations py/px [B,H,W,9],
    with the DCNv2 modulation mask folded into the corner weights.
    Out-of-bounds neighbors contribute zero (torchvision deform_conv2d)."""
    B, H, W, C = x_nhwc.shape
    K = py.shape[-1]
    y0 = jnp.floor(py)
    x0 = jnp.floor(px)
    y0i = y0.astype(jnp.int32)
    x0i = x0.astype(jnp.int32)
    y1i = y0i + 1
    x1i = x0i + 1
    wy1 = py - y0
    wy0 = 1.0 - wy1
    wx1 = px - x0
    wx0 = 1.0 - wx1

    x_flat = x_nhwc.reshape(B * H * W, C)
    b_idx = jnp.arange(B, dtype=jnp.int32).reshape(B, 1, 1, 1)

    # TODO(synk): this data-dependent per-pixel fractional gather stays in XLA;
    # a VMEM-resident Pallas gather (row-band + halo DMA) is not attempted.
    def corner(yi, xi, wt):
        valid = (yi >= 0) & (yi < H) & (xi >= 0) & (xi < W)
        w = wt * valid.astype(x_nhwc.dtype) * mask           # modulation fused in
        yc = jnp.clip(yi, 0, H - 1)
        xc = jnp.clip(xi, 0, W - 1)
        flat = (b_idx * H + yc) * W + xc                     # [B,H,W,K]
        vals = jnp.take(x_flat, flat.reshape(-1), axis=0).reshape(B, H, W, K, C)
        return vals * w[..., None]

    return (
        corner(y0i, x0i, wy0 * wx0)
        + corner(y0i, x1i, wy0 * wx1)
        + corner(y1i, x0i, wy1 * wx0)
        + corner(y1i, x1i, wy1 * wx1)
    )


def deform_conv_forward(x_nchw, params):
    B, Cin, H, W = x_nchw.shape
    Cout = params["weight"].shape[0]
    M = B * H * W
    K = 9 * Cin
    Np = _round_up(Cout, 128)                          # lane-dense output channels
    tm, Mp, vmem_limit = _plan_matmul_tiling(M, K, Np)

    x = jnp.transpose(x_nchw, (0, 2, 3, 1)).astype(jnp.float32)   # NHWC

    # --- conv_offset_mask: small regular 3x3 conv (lax conv, no 9x im2col).
    # Output channels permuted at weight-prep time so dy / dx / mask come out
    # as contiguous channel groups (no strided lane slices on the activation).
    perm = jnp.concatenate([jnp.arange(0, 18, 2),      # dy channels
                            jnp.arange(1, 18, 2),      # dx channels
                            jnp.arange(18, 27)])       # mask channels
    w_off = params["w_off"][perm]
    b_off = params["b_off"][perm]
    w_off_hwio = jnp.transpose(w_off, (2, 3, 1, 0))    # OIHW -> HWIO
    offmask = jax.lax.conv_general_dilated(
        x, w_off_hwio, window_strides=(1, 1), padding=((1, 1), (1, 1)),
        dimension_numbers=("NHWC", "HWIO", "NHWC"),
    ) + b_off                                          # [B,H,W,27]
    dy = offmask[..., 0:9]                             # Δy per kernel point k
    dx = offmask[..., 9:18]                            # Δx per kernel point k
    mask = jax.nn.sigmoid(offmask[..., 18:27])         # [B,H,W,9]

    # --- deformable sampling grid (stride 1, pad 1, dilation 1)
    hh = jnp.arange(H, dtype=jnp.float32)
    ww = jnp.arange(W, dtype=jnp.float32)
    kh = jnp.arange(3, dtype=jnp.float32)
    kw = jnp.arange(3, dtype=jnp.float32)
    base_y = jnp.broadcast_to(
        hh[:, None, None, None] - 1.0 + kh[None, None, :, None], (H, W, 3, 3)
    ).reshape(H, W, 9)
    base_x = jnp.broadcast_to(
        ww[None, :, None, None] - 1.0 + kw[None, None, None, :], (H, W, 3, 3)
    ).reshape(H, W, 9)
    py = base_y[None] + dy
    px = base_x[None] + dx

    # modulated deformable im2col, natural (k, c) K-order -> no cols transpose
    cols = _gather_bilinear_modulated(x, py, px, mask)           # [B,H,W,9,Cin]
    cols2d = cols.reshape(M, K).astype(jnp.bfloat16)             # bf16 MXU operand
    if Mp != M:
        cols2d = jnp.pad(cols2d, ((0, Mp - M), (0, 0)))          # small, bounded waste

    # main weight reordered to (k, c) K-order, zero-padded to Np lanes, bf16
    w2d = params["weight"].reshape(Cout, Cin, 9).transpose(0, 2, 1).reshape(Cout, K)
    w2d = jnp.pad(w2d, ((0, Np - Cout), (0, 0))).T.astype(jnp.bfloat16)   # [K, Np]

    # --- Pallas: deformable conv as matmul (no bias), fused BN-stat partials.
    # NOTE: the conv bias is omitted: under train-mode BN a per-channel constant
    # cancels exactly (and this module zero-inits it).  Fold params["bias"] into
    # `shift` below if eval-mode (running-stat) BN is ever needed.
    pre, csum, csq = matmul_stats(cols2d, w2d, tm=tm, vmem_limit_bytes=vmem_limit)

    # --- BatchNorm2d (training-mode forward: batch stats over N,H,W) + ReLU
    # TODO(synk): running_mean/running_var state updates (momentum=0.1) are not
    # materialized; they do not affect the forward output.
    # Final tiny cross-sublane/core reduction of the (16, Np) partials in XLA.
    mean = jnp.sum(csum, axis=0) / M
    # fp32 E[x^2]-mean^2 can lose precision for very large M; clamp guards the
    # cancellation (documented deviation from the fp32 PyTorch reference).
    var = jnp.maximum(jnp.sum(csq, axis=0) / M - mean * mean, 0.0)
    gamma_p = jnp.pad(params["gamma"], (0, Np - Cout))
    beta_p = jnp.pad(params["beta"], (0, Np - Cout))
    scale = gamma_p * jax.lax.rsqrt(var + 1e-5)
    shift = beta_p - mean * scale

    tm_bn = _plan_bn_tiling(Mp, Np, tm)
    out2d = bn_relu(pre, scale, shift, tm=tm_bn)                  # [Mp, Np] f32

    out = out2d[:M, :Cout].reshape(B, H, W, Cout)
    # TODO(synk): keeping NHWC (or fusing BN+ReLU into the consumer) would save
    # this final full-HBM-pass transpose; NCHW is kept to match the module API.
    return jnp.transpose(out, (0, 3, 1, 2))


if __name__ == "__main__":
    key = jax.random.PRNGKey(0)
    k_x, k_w = jax.random.split(key)
    B, Cin, Cout, H, W = 2, 4, 8, 16, 16
    x = jax.random.normal(k_x, (B, Cin, H, W), jnp.float32)
    params = init_params(k_w, Cin, Cout)
    out = deform_conv_forward(x, params)
    jax.block_until_ready(out)
    assert out.shape == (B, Cout, H, W)
    print("KERNEL_OK")
</pallas_src>

<mosaic_0001>
module attributes {stable_mosaic.version = 11 : i64} {
  func.func @_mm_stats_kernel(%arg0: i32, %arg1: i32, %arg2: memref<256x36xbf16, #tpu.memory_space<vmem>>, %arg3: memref<36x128xbf16, #tpu.memory_space<vmem>>, %arg4: memref<256x128xbf16, #tpu.memory_space<vmem>>, %arg5: memref<8x128xf32, #tpu.memory_space<vmem>>, %arg6: memref<8x128xf32, #tpu.memory_space<vmem>>) attributes {dimension_semantics = [#tpu.dimension_semantics<parallel>, #tpu.dimension_semantics<arbitrary>], iteration_bounds = array<i64: 2, 1>, scalar_prefetch = 0 : i64, scratch_operands = 0 : i64, tpu.core_type = #tpu.core_type<tc>, window_params = [{transform_indices = @transform_0, window_bounds = array<i64: 256, 36>}, {pipeline_mode = #tpu.pipeline_mode<synchronous>, transform_indices = @transform_1, window_bounds = array<i64: 36, 128>}, {transform_indices = @transform_2, window_bounds = array<i64: 256, 128>}, {transform_indices = @transform_3, window_bounds = array<i64: 8, 128>}, {transform_indices = @transform_4, window_bounds = array<i64: 8, 128>}]} {
    %c0_i32 = arith.constant 0 : i32
    %0 = arith.cmpi eq, %arg1, %c0_i32 : i32
    %1 = arith.extui %0 : i1 to i32
    %c0_i32_0 = arith.constant 0 : i32
    %2 = arith.cmpi ne, %1, %c0_i32_0 : i32
    scf.if %2 {
      %cst_16 = arith.constant 0.000000e+00 : f32
      %18 = vector.broadcast %cst_16 : f32 to vector<8x128xf32>
      %c0_17 = arith.constant 0 : index
      %c0_18 = arith.constant 0 : index
      %19 = vector.load %arg5[%c0_17, %c0_18] : memref<8x128xf32, #tpu.memory_space<vmem>>, vector<8x128xf32>
      tpu.vector_store %arg5[%c0_17, %c0_18], %18 {strides = array<i32>} : memref<8x128xf32, #tpu.memory_space<vmem>>, vector<8x128xf32>,
      %cst_19 = arith.constant 0.000000e+00 : f32
      %20 = vector.broadcast %cst_19 : f32 to vector<8x128xf32>
      %c0_20 = arith.constant 0 : index
      %c0_21 = arith.constant 0 : index
      %21 = vector.load %arg6[%c0_20, %c0_21] : memref<8x128xf32, #tpu.memory_space<vmem>>, vector<8x128xf32>
      tpu.vector_store %arg6[%c0_20, %c0_21], %20 {strides = array<i32>} : memref<8x128xf32, #tpu.memory_space<vmem>>, vector<8x128xf32>,
    } else {
    }
    %c0 = arith.constant 0 : index
    %c0_1 = arith.constant 0 : index
    %3 = vector.load %arg2[%c0, %c0_1] : memref<256x36xbf16, #tpu.memory_space<vmem>>, vector<256x36xbf16>
    %c0_2 = arith.constant 0 : index
    %c0_3 = arith.constant 0 : index
    %4 = vector.load %arg3[%c0_2, %c0_3] : memref<36x128xbf16, #tpu.memory_space<vmem>>, vector<36x128xbf16>
    %cst = arith.constant dense<0.000000e+00> : vector<256x128xf32>
    %5 = tpu.matmul %3, %4, %cst {dimension_numbers = #tpu.dot_dimension_numbers<[1], [0], [0], [1], [0, 0, 1, 1], [], []>} : vector<256x36xbf16>, vector<36x128xbf16>, vector<256x128xf32> -> vector<256x128xf32>
    %6 = arith.truncf %5 : vector<256x128xf32> to vector<256x128xbf16>
    %c0_4 = arith.constant 0 : index
    %c0_5 = arith.constant 0 : index
    %7 = vector.load %arg4[%c0_4, %c0_5] : memref<256x128xbf16, #tpu.memory_space<vmem>>, vector<256x128xbf16>
    tpu.vector_store %arg4[%c0_4, %c0_5], %6 {strides = array<i32>} : memref<256x128xbf16, #tpu.memory_space<vmem>>, vector<256x128xbf16>,
    %8 = vector.shape_cast %5 : vector<256x128xf32> to vector<32x8x128xf32>
    %c0_6 = arith.constant 0 : index
    %c0_7 = arith.constant 0 : index
    %9 = vector.load %arg5[%c0_6, %c0_7] : memref<8x128xf32, #tpu.memory_space<vmem>>, vector<8x128xf32>
    %cst_8 = arith.constant dense<0.000000e+00> : vector<8x128xf32>
    %10 = vector.multi_reduction <add>, %8, %cst_8 [0] : vector<32x8x128xf32> to vector<8x128xf32>
    %11 = arith.addf %9, %10 : vector<8x128xf32>
    %c0_9 = arith.constant 0 : index
    %c0_10 = arith.constant 0 : index
    %12 = vector.load %arg5[%c0_9, %c0_10] : memref<8x128xf32, #tpu.memory_space<vmem>>, vector<8x128xf32>
    tpu.vector_store %arg5[%c0_9, %c0_10], %11 {strides = array<i32>} : memref<8x128xf32, #tpu.memory_space<vmem>>, vector<8x128xf32>,
    %c0_11 = arith.constant 0 : index
    %c0_12 = arith.constant 0 : index
    %13 = vector.load %arg6[%c0_11, %c0_12] : memref<8x128xf32, #tpu.memory_space<vmem>>, vector<8x128xf32>
    %14 = arith.mulf %8, %8 : vector<32x8x128xf32>
    %cst_13 = arith.constant dense<0.000000e+00> : vector<8x128xf32>
    %15 = vector.multi_reduction <add>, %14, %cst_13 [0] : vector<32x8x128xf32> to vector<8x128xf32>
    %16 = arith.addf %13, %15 : vector<8x128xf32>
    %c0_14 = arith.constant 0 : index
    %c0_15 = arith.constant 0 : index
    %17 = vector.load %arg6[%c0_14, %c0_15] : memref<8x128xf32, #tpu.memory_space<vmem>>, vector<8x128xf32>
    tpu.vector_store %arg6[%c0_14, %c0_15], %16 {strides = array<i32>} : memref<8x128xf32, #tpu.memory_space<vmem>>, vector<8x128xf32>,
    return
  }
  func.func @transform_0(%arg0: i32, %arg1: i32) -> (i32, i32) {
    %c1_i32 = arith.constant 1 : i32
    %0 = arith.muli %arg0, %c1_i32 : i32
    %1 = arith.addi %0, %arg1 : i32
    %c0_i32 = arith.constant 0 : i32
    %c0_i32_0 = arith.constant 0 : i32
    return %1, %c0_i32 : i32, i32
  }
  func.func @transform_1(%arg0: i32, %arg1: i32) -> (i32, i32) {
    %c0_i32 = arith.constant 0 : i32
    %c0_i32_0 = arith.constant 0 : i32
    %c0_i32_1 = arith.constant 0 : i32
    return %c0_i32, %c0_i32_0 : i32, i32
  }
  func.func @transform_2(%arg0: i32, %arg1: i32) -> (i32, i32) {
    %c1_i32 = arith.constant 1 : i32
    %0 = arith.muli %arg0, %c1_i32 : i32
    %1 = arith.addi %0, %arg1 : i32
    %c0_i32 = arith.constant 0 : i32
    %c0_i32_0 = arith.constant 0 : i32
    return %1, %c0_i32 : i32, i32
  }
  func.func @transform_3(%arg0: i32, %arg1: i32) -> (i32, i32) {
    %c0_i32 = arith.constant 0 : i32
    %c0_i32_0 = arith.constant 0 : i32
    return %arg0, %c0_i32 : i32, i32
  }
  func.func @transform_4(%arg0: i32, %arg1: i32) -> (i32, i32) {
    %c0_i32 = arith.constant 0 : i32
    %c0_i32_0 = arith.constant 0 : i32
    return %arg0, %c0_i32 : i32, i32
  }
}

</mosaic_0001>

<llo_original>
// kernel: tpu_custom_call.1
$region0: #{tpu_custom_call.1}
  #allocation0 [shape = 'u32[]', space=smem, size = 0x4, offset = 0x4, fixed_abs, tag = 'smem constant byte address 0x4 - core index']
  #allocation1 [shape = 'u32[144,128]{1,0:T(1,128)}', space=vmem, size = 0x12000, scoped, tag = 'internal scratch']
  %s0 = inlined_call_operand.vmem [shape: bf16[512,36], index: 0, kind: input, shape index: {}]
  %s1 = inlined_call_operand.vmem [shape: bf16[36,128], index: 1, kind: input, shape index: {}]
  %s2 = inlined_call_operand.hbm [shape: bf16[512,128], index: 2, kind: output, shape index: {0}]
  %s3 = inlined_call_operand.hbm [shape: f32[16,128], index: 3, kind: output, shape index: {1}]
  %s4 = inlined_call_operand.hbm [shape: f32[16,128], index: 4, kind: output, shape index: {2}]
  %5 = xla_tuple %s2, %s3, %s4
  %s6 = sld [smem:[#allocation0]]
  $region61: #{tpu_custom_call.1} parent=0
    _
  %s8 = ssub.s32 1, %s6
  %s9 = scalar_select 0, %s8, %s6
  $region1: #{tpu_custom_call.1} parent=0
    #allocation2 [shape = 'u8[131072]{0}', space=vmem, size = 0x20000, scoped, tag = 'output window, operand 0']
    #allocation3 [shape = 's32[2]{0}', space=sflag, size = 0x8, scoped, tag = 'scoped memory for tpu_custom_call.1']
    #allocation4 [shape = 'u8[8192]{0}', space=vmem, size = 0x2000, scoped, tag = 'output window, operand 1']
    #allocation5 [shape = 's32[2]{0}', space=sflag, size = 0x8, scoped, tag = 'scoped memory for tpu_custom_call.1']
    #allocation6 [shape = 'u8[8192]{0}', space=vmem, size = 0x2000, scoped, tag = 'output window, operand 2']
    %10 = vsyncpa [#allocation3], 0
    %s11 = scalar_lea.sflag [#allocation3], 1
    %12 = vsyncpa %s11, 0
    %13 = vsyncpa [#allocation5], 0
    %s14 = scalar_lea.sflag [#allocation5], 1
    %15 = vsyncpa %s14, 0
    loop: start=0, step=1, limit=4
    $region2: #{tpu_custom_call.1} parent=1 // loop_pre_header
      _
    $region3: #{tpu_custom_call.1} parent=1 // loop_header
      %s17 = sphi 0, %s21
      %p18 = scmp.ge.s32.totalorder %s17, 4
      %s24 = sphi 0, %s36
      %s25 = sphi 0, %s32
      %s26 = sphi 0, %s24
      %s27 = sphi 0, %s25
      %s28 = sphi 0, %s26
      %s29 = sphi 0, %s27
      %s41 = sphi 0, %s43
      %s44 = sphi 0, %s41
      %s45 = sphi 0, %s44
      %s61 = sphi 0, %s45
      %s65 = sphi 0, %s65
      %s67 = sphi 0, %s65
      %s68 = sphi 0, %s67
      %s82 = sphi 0, %s68
      %s90 = sphi 0, %s92
      %s93 = sphi 0, %s90
      %s94 = sphi 0, %s93
      %s110 = sphi 0, %s94
      %s116 = sphi 0, %s118
      %s119 = sphi 0, %s116
      %s120 = sphi 0, %s119
      %s136 = sphi 0, %s120
      %s142 = sphi 0, %s144
      %s145 = sphi 0, %s142
      %s146 = sphi 0, %s145
      %s162 = sphi 0, %s146
    $region4: #{tpu_custom_call.1} parent=1 // loop_header_branch
      %20 = sbr.rel (%p18) target = $region8
    $region5: #{tpu_custom_call.1} parent=1 // loop_body
      %s22 = ssub.s32 %s17, 1
      %s23 = ssub.s32 %s17, 2
      %s30 = sadd.s32 1, %s25
      %p31 = scmp.ge.s32.totalorder %s30, 1
      %s32 = scalar_select %p31, 0, %s30
      %s33 = sadd.s32 1, %s24
      %s34 = scalar_select %p31, %s33, %s24
      %p35 = scmp.ge.s32.totalorder %s34, 2
      %s36 = scalar_select %p35, 0, %s34
      %s37 = sadd.s32 %s24, %s25
      %s38 = sadd.s32 %s36, %s32
      %s39 = ssub.s32 %s37, %s38
      %p40 = scmp.eq.s32.totalorder %s39, 0
      %s42 = sadd.s32 %s41, 1
      %s43 = scalar_select %p40, %s41, %s42
      %p46 = pneg %p40
      %p47 = scmp.eq.s32.totalorder %s17, 1
      %p48 = por %p46, %p47
      %p49 = scmp.ne.s32.totalorder %s41, %s44
      %p50 = scmp.eq.s32.totalorder %s17, 0
      %p51 = por %p49, %p50
      %p52 = scmp.ne.s32.totalorder %s41, %s44
      %p53 = scmp.eq.s32.totalorder %s22, 1
      %p54 = por %p52, %p53
      %p55 = scmp.ne.s32.totalorder %s44, %s45
      %p56 = scmp.eq.s32.totalorder %s22, 0
      %p57 = por %p55, %p56
      %p58 = scmp.ne.s32.totalorder %s44, %s45
      %p59 = scmp.eq.s32.totalorder %s23, 1
      %p60 = por %p58, %p59
      %p62 = scmp.ne.s32.totalorder %s45, %s61
      %p63 = scmp.eq.s32.totalorder %s23, 0
      %p64 = por %p62, %p63
      %s66 = sadd.s32 %s65, 1
      %p69 = scmp.eq.s32.totalorder %s17, 1
      %p70 = scmp.ne.s32.totalorder %s65, %s67
      %p71 = scmp.eq.s32.totalorder %s17, 0
      %p72 = por %p70, %p71
      %p73 = scmp.ne.s32.totalorder %s65, %s67
      %p74 = scmp.eq.s32.totalorder %s22, 1
      %p75 = por %p73, %p74
      %p76 = scmp.ne.s32.totalorder %s67, %s68
      %p77 = scmp.eq.s32.totalorder %s22, 0
      %p78 = por %p76, %p77
      %p79 = scmp.ne.s32.totalorder %s67, %s68
      %p80 = scmp.eq.s32.totalorder %s23, 1
      %p81 = por %p79, %p80
      %p83 = scmp.ne.s32.totalorder %s68, %s82
      %p84 = scmp.eq.s32.totalorder %s23, 0
      %p85 = por %p83, %p84
      %s86 = sadd.s32 %s24, %s25
      %s87 = sadd.s32 %s36, %s32
      %s88 = ssub.s32 %s86, %s87
      %p89 = scmp.eq.s32.totalorder %s88, 0
      %s91 = sadd.s32 %s90, 1
      %s92 = scalar_select %p89, %s90, %s91
      %p95 = pneg %p89
      %p96 = scmp.eq.s32.totalorder %s17, 1
      %p97 = por %p95, %p96
      %p98 = scmp.ne.s32.totalorder %s90, %s93
      %p99 = scmp.eq.s32.totalorder %s17, 0
      %p100 = por %p98, %p99
      %p101 = scmp.ne.s32.totalorder %s90, %s93
      %p102 = scmp.eq.s32.totalorder %s22, 1
      %p103 = por %p101, %p102
      %p104 = scmp.ne.s32.totalorder %s93, %s94
      %p105 = scmp.eq.s32.totalorder %s22, 0
      %p106 = por %p104, %p105
      %p107 = scmp.ne.s32.totalorder %s93, %s94
      %p108 = scmp.eq.s32.totalorder %s23, 1
      %p109 = por %p107, %p108
      %p111 = scmp.ne.s32.totalorder %s94, %s110
      %p112 = scmp.eq.s32.totalorder %s23, 0
      %p113 = por %p111, %p112
      %s114 = ssub.s32 %s24, %s36
      %p115 = scmp.eq.s32.totalorder %s114, 0
      %s117 = sadd.s32 %s116, 1
      %s118 = scalar_select %p115, %s116, %s117
      %p121 = pneg %p115
      %p122 = scmp.eq.s32.totalorder %s17, 1
      %p123 = por %p121, %p122
      %p124 = scmp.ne.s32.totalorder %s116, %s119
      %p125 = scmp.eq.s32.totalorder %s17, 0
      %p126 = por %p124, %p125
      %p127 = scmp.ne.s32.totalorder %s116, %s119
      %p128 = scmp.eq.s32.totalorder %s22, 1
      %p129 = por %p127, %p128
      %p130 = scmp.ne.s32.totalorder %s119, %s120
      %p131 = scmp.eq.s32.totalorder %s22, 0
      %p132 = por %p130, %p131
      %p133 = scmp.ne.s32.totalorder %s119, %s120
      %p134 = scmp.eq.s32.totalorder %s23, 1
      %p135 = por %p133, %p134
      %p137 = scmp.ne.s32.totalorder %s120, %s136
      %p138 = scmp.eq.s32.totalorder %s23, 0
      %p139 = por %p137, %p138
      %s140 = ssub.s32 %s24, %s36
      %p141 = scmp.eq.s32.totalorder %s140, 0
      %s143 = sadd.s32 %s142, 1
      %s144 = scalar_select %p141, %s142, %s143
      %p147 = pneg %p141
      %p148 = scmp.eq.s32.totalorder %s17, 1
      %p149 = por %p147, %p148
      %p150 = scmp.ne.s32.totalorder %s142, %s145
      %p151 = scmp.eq.s32.totalorder %s17, 0
      %p152 = por %p150, %p151
      %p153 = scmp.ne.s32.totalorder %s142, %s145
      %p154 = scmp.eq.s32.totalorder %s22, 1
      %p155 = por %p153, %p154
      %p156 = scmp.ne.s32.totalorder %s145, %s146
      %p157 = scmp.eq.s32.totalorder %s22, 0
      %p158 = por %p156, %p157
      %p159 = scmp.ne.s32.totalorder %s145, %s146
      %p160 = scmp.eq.s32.totalorder %s23, 1
      %p161 = por %p159, %p160
      %p163 = scmp.ne.s32.totalorder %s146, %s162
      %p164 = scmp.eq.s32.totalorder %s23, 0
      %p165 = por %p163, %p164
      %p166 = scmp.le.s32.totalorder 1, %s17
      %p167 = scmp.lt.s32.totalorder %s17, 3
      %p168 = pnand %p166, %p167
      %p169 = pneg %p168
      // Predicated region
      $region9: #{tpu_custom_call.1} parent=5 // pred_check
        _
      $region10: #{tpu_custom_call.1} parent=5 // pred_check_branch
        %171 = sbr.rel (%p168) target = $region12
      $region11: #{tpu_custom_call.1} parent=5 // pred_region
        %s172 = ssub.s32 %s17, 1
        // Predicated region
        $region13: #{tpu_custom_call.1} parent=11 // pred_check
          %p173 = pneg %p78
        $region14: #{tpu_custom_call.1} parent=11 // pred_check_branch
          %175 = sbr.rel (%p173) target = $region16
        $region15: #{tpu_custom_call.1} parent=11 // pred_region
          _
        $region16: #{tpu_custom_call.1} parent=11 // pred_fallthru
          _
      $region12: #{tpu_custom_call.1} parent=5 // pred_fallthru
        _
      %p176 = scmp.lt.s32.totalorder %s17, 2
      // Predicated region
      $region17: #{tpu_custom_call.1} parent=5 // pred_check
        %p177 = pneg %p176
      $region18: #{tpu_custom_call.1} parent=5 // pred_check_branch
        %179 = sbr.rel (%p177) target = $region20
      $region19: #{tpu_custom_call.1} parent=5 // pred_region
        // Predicated region
        $region21: #{tpu_custom_call.1} parent=19 // pred_check
          %p180 = pneg %p51
        $region22: #{tpu_custom_call.1} parent=19 // pred_check_branch
          %182 = sbr.rel (%p180) target = $region24
        $region23: #{tpu_custom_call.1} parent=19 // pred_region
          %s183 = sadd.s32 %s24, %s25
          %s184 = smul.u32 32, %s183
          %p185 = scmp.lt.s32.totalorder %s184, 63
          %s186 = scalar_select %p185, %s184, 63
          %s187 = smul.addr %s186, 4
          %s188 = scalar_lea.vmem %s0, %s187
          %s189 = sadd.s32 %s24, %s25
          %s190 = smul.u32 32, %s189
        $region24: #{tpu_custom_call.1} parent=19 // pred_fallthru
          _
      $region20: #{tpu_custom_call.1} parent=5 // pred_fallthru
        _
      %p191 = scmp.le.s32.totalorder 1, %s17
      %p192 = scmp.lt.s32.totalorder %s17, 3
      %p193 = pnand %p191, %p192
      %p194 = pneg %p193
      // Predicated region
      $region25: #{tpu_custom_call.1} parent=5 // pred_check
        _
      $region26: #{tpu_custom_call.1} parent=5 // pred_check_branch
        %196 = sbr.rel (%p193) target = $region28
      $region27: #{tpu_custom_call.1} parent=5 // pred_region
        %s197 = ssub.s32 %s17, 1
        %s198 = sadd.s32 %s26, %s27
        %s199 = smul.u32 32, %s198
        %p200 = scmp.lt.s32.totalorder %s199, 63
        %s201 = scalar_select %p200, %s199, 63
        %s202 = smul.addr %s201, 4
        %s203 = scalar_lea.vmem %s0, %s202
        %p204 = pneg %p57
        %p205 = pneg %p54
        %p206 = pneg %p78
        %p207 = pneg %p75
        %p208 = pneg %p106
        %p209 = pneg %p103
        %s210 = sand.u32 %s93, 1
        %s211 = scalar_lea.sflag [#allocation3], %s210
        %s212 = sand.u32 %s93, 1
        %s213 = smul.addr %s212, 128
        %s214 = scalar_lea.vmem [#allocation2], %s213
        %p215 = pneg %p132
        %p216 = pneg %p129
        %s217 = sand.u32 %s22, 1
        %s218 = scalar_lea.sflag [#allocation5], %s217
        %s219 = sand.u32 %s119, 1
        %s220 = smul.addr %s219, 8
        %s221 = scalar_lea.vmem [#allocation4], %s220
        %p222 = pneg %p158
        %p223 = pneg %p155
        %s224 = sand.u32 %s22, 1
        %s225 = scalar_lea.sflag [#allocation5], %s224
        %s226 = sand.u32 %s145, 1
        %s227 = smul.addr %s226, 8
        %s228 = scalar_lea.vmem [#allocation6], %s227
        %s229 = sadd.s32 %s26, %s27
        %s230 = smul.u32 32, %s229
        %p231 = scmp.lt.s32.totalorder %s230, 63
        %s232 = scalar_select %p231, %s230, 63
        %s233 = smul.addr %s232, 4
        %s234 = scalar_lea.vmem %s0, %s233
        %s235 = sadd.s32 %s26, %s27
        %s236 = smul.u32 32, %s235
        %s237 = sadd.s32 %s26, %s27
        %s238 = smul.u32 32, %s237
        %p240 = scmp.eq.s32.totalorder %s27, 0
        // Predicated region
        $region29: #{tpu_custom_call.1} parent=27 // pred_check
          %p241 = pneg %p240
        $region30: #{tpu_custom_call.1} parent=27 // pred_check_branch
          %243 = sbr.rel (%p241) target = $region32
        $region31: #{tpu_custom_call.1} parent=27 // pred_region
          %244 = vst [vmem:[%s221] sm:$0xff] 0.0
          %245 = vst [vmem:[%s228] sm:$0xff] 0.0
        $region32: #{tpu_custom_call.1} parent=27 // pred_fallthru
          _
        %v246 = vld [vmem:[%s234] sm:$0xf]
        %v247 = vld [vmem:[%s234 + $0x4] sm:$0xf]
        %v248 = vld [vmem:[%s234 + $0x8] sm:$0xf]
        %v249 = vld [vmem:[%s234 + $0xc] sm:$0xf]
        %v250 = vld [vmem:[%s234 + $0x10] sm:$0xf]
        %v251 = vld [vmem:[%s234 + $0x14] sm:$0xf]
        %v252 = vld [vmem:[%s234 + $0x18] sm:$0xf]
        %v253 = vld [vmem:[%s234 + $0x1c] sm:$0xf]
        %v254 = vld [vmem:[%s234 + $0x20] sm:$0xf]
        %v255 = vld [vmem:[%s234 + $0x24] sm:$0xf]
        %v256 = vld [vmem:[%s234 + $0x28] sm:$0xf]
        %v257 = vld [vmem:[%s234 + $0x2c] sm:$0xf]
        %v258 = vld [vmem:[%s234 + $0x30] sm:$0xf]
        %v259 = vld [vmem:[%s234 + $0x34] sm:$0xf]
        %v260 = vld [vmem:[%s234 + $0x38] sm:$0xf]
        %v261 = vld [vmem:[%s234 + $0x3c] sm:$0xf]
        %v262 = vld [vmem:[%s234 + $0x40] sm:$0xf]
        %v263 = vld [vmem:[%s234 + $0x44] sm:$0xf]
        %v264 = vld [vmem:[%s234 + $0x48] sm:$0xf]
        %v265 = vld [vmem:[%s234 + $0x4c] sm:$0xf]
        %v266 = vld [vmem:[%s234 + $0x50] sm:$0xf]
        %v267 = vld [vmem:[%s234 + $0x54] sm:$0xf]
        %v268 = vld [vmem:[%s234 + $0x58] sm:$0xf]
        %v269 = vld [vmem:[%s234 + $0x5c] sm:$0xf]
        %v270 = vld [vmem:[%s234 + $0x60] sm:$0xf]
        %v271 = vld [vmem:[%s234 + $0x64] sm:$0xf]
        %v272 = vld [vmem:[%s234 + $0x68] sm:$0xf]
        %v273 = vld [vmem:[%s234 + $0x6c] sm:$0xf]
        %v274 = vld [vmem:[%s234 + $0x70] sm:$0xf]
        %v275 = vld [vmem:[%s234 + $0x74] sm:$0xf]
        %v276 = vld [vmem:[%s234 + $0x78] sm:$0xf]
        %v277 = vld [vmem:[%s234 + $0x7c] sm:$0xf]
        %v278 = vld [vmem:[%s1] sm:$0xf]
        %v279 = vld [vmem:[%s1 + $0x4] sm:$0xf]
        %v280 = vld [vmem:[%s1 + $0x8] sm:$0xf]
        %v281 = vld [vmem:[%s1 + $0xc] sm:$0xf]
        %v282 = vld [vmem:[%s1 + $0x10] sm:$0x3]
        %v315 = vunpack.c.l.b16 %v246
        %v316 = vunpack.c.l.b16 %v247
        %v317 = vunpack.c.l.b16 %v248
        %v318 = vunpack.c.l.b16 %v249
        %v319 = vunpack.c.l.b16 %v250
        %v320 = vunpack.c.l.b16 %v251
        %v321 = vunpack.c.l.b16 %v252
        %v322 = vunpack.c.l.b16 %v253
        %v323 = vunpack.c.l.b16 %v254
        %v324 = vunpack.c.l.b16 %v255
        %v325 = vunpack.c.l.b16 %v256
        %v326 = vunpack.c.l.b16 %v257
        %v327 = vunpack.c.l.b16 %v258
        %v328 = vunpack.c.l.b16 %v259
        %v329 = vunpack.c.l.b16 %v260
        %v330 = vunpack.c.l.b16 %v261
        %v331 = vunpack.c.l.b16 %v262
        %v332 = vunpack.c.l.b16 %v263
        %v333 = vunpack.c.l.b16 %v264
        %v334 = vunpack.c.l.b16 %v265
        %v335 = vunpack.c.l.b16 %v266
        %v336 = vunpack.c.l.b16 %v267
        %v337 = vunpack.c.l.b16 %v268
        %v338 = vunpack.c.l.b16 %v269
        %v339 = vunpack.c.l.b16 %v270
        %v340 = vunpack.c.l.b16 %v271
        %v341 = vunpack.c.l.b16 %v272
        %v342 = vunpack.c.l.b16 %v273
        %v343 = vunpack.c.l.b16 %v274
        %v344 = vunpack.c.l.b16 %v275
        %v345 = vunpack.c.l.b16 %v276
        %v346 = vunpack.c.l.b16 %v277
        %v347 = vpack.c.b16 %v316, %v315
        %v348 = vpack.c.b16 %v318, %v317
        %v349 = vpack.c.b16 %v320, %v319
        %v350 = vpack.c.b16 %v322, %v321
        %v351 = vpack.c.b16 %v324, %v323
        %v352 = vpack.c.b16 %v326, %v325
        %v353 = vpack.c.b16 %v328, %v327
        %v354 = vpack.c.b16 %v330, %v329
        %v355 = vpack.c.b16 %v332, %v331
        %v356 = vpack.c.b16 %v334, %v333
        %v357 = vpack.c.b16 %v336, %v335
        %v358 = vpack.c.b16 %v338, %v337
        %v359 = vpack.c.b16 %v340, %v339
        %v360 = vpack.c.b16 %v342, %v341
        %v361 = vpack.c.b16 %v344, %v343
        %v362 = vpack.c.b16 %v346, %v345
        %v368 = vunpack.c.l.b16 %v278
        %v369 = vunpack.c.l.b16 %v279
        %v370 = vunpack.c.l.b16 %v280
        %v371 = vunpack.c.l.b16 %v281
        %v372 = vunpack.c.l.b16 %v282
        %v373 = vpack.c.b16 %v369, %v368
        %v374 = vpack.c.b16 %v371, %v370
        %v375 = vpack.c.b16 %v372, %v372
        %vm378 = vcmask 293888
        %v380 = vsel %vm378, %v347, 0
        %v383 = vsel %vm378, %v348, 0
        %v386 = vsel %vm378, %v349, 0
        %v389 = vsel %vm378, %v350, 0
        %v392 = vsel %vm378, %v351, 0
        %v395 = vsel %vm378, %v352, 0
        %v398 = vsel %vm378, %v353, 0
        %v401 = vsel %vm378, %v354, 0
        %v404 = vsel %vm378, %v355, 0
        %v407 = vsel %vm378, %v356, 0
        %v410 = vsel %vm378, %v357, 0
        %v413 = vsel %vm378, %v358, 0
        %v416 = vsel %vm378, %v359, 0
        %v419 = vsel %vm378, %v360, 0
        %v422 = vsel %vm378, %v361, 0
        %v425 = vsel %vm378, %v362, 0
        %vm427 = vcmask 1041408
        %v429 = vsel %vm427, %v375, 0
        %431 = vmatprep.subr.bf16.mxu0 0
        %432 = vmatpush1.bf16.msra.mxu0 0
        %433 = vmatprep.subr.bf16.mxu0 0
        %434 = vmatpush1.bf16.msra.mxu0 0
        %435 = vmatprep.subr.bf16.mxu0 0
        %436 = vmatpush1.bf16.msra.mxu0 0
        %437 = vmatprep.subr.bf16.mxu0 0
        %438 = vmatpush1.bf16.msra.mxu0 0
        %439 = vmatprep.subr.bf16.mxu0 0
        %440 = vmatpush1.bf16.msra.mxu0 0
        %441 = vmatprep.subr.bf16.mxu0 0
        %442 = vmatpush1.bf16.msra.mxu0 %v429
        %443 = vmatprep.subr.bf16.mxu0 0
        %444 = vmatpush1.bf16.msra.mxu0 %v374
        %445 = vmatprep.subr.bf16.mxu0 0
        %446 = vmatpush1.bf16.msra.mxu0 %v373
        %447 = vmatprep.subr.bf16.mxu0 0
        %448 = vmatpush2.bf16.msra.mxu0 0
        %449 = vmatprep.subr.bf16.mxu0 0
        %450 = vmatpush2.bf16.msra.mxu0 0
        %451 = vmatprep.subr.bf16.mxu0 0
        %452 = vmatpush2.bf16.msra.mxu0 0
        %453 = vmatprep.subr.bf16.mxu0 0
        %454 = vmatpush2.bf16.msra.mxu0 0
        %455 = vmatprep.subr.bf16.mxu0 0
        %456 = vmatpush2.bf16.msra.mxu0 0
        %457 = vmatprep.subr.bf16.mxu0 0
        %458 = vmatpush2.bf16.msra.mxu0 0
        %459 = vmatprep.subr.bf16.mxu0 0
        %460 = vmatpush2.bf16.msra.mxu0 0
        %461 = vmatprep.subr.bf16.mxu0 0
        %462 = vmatpush2.bf16.msra.mxu0 0
        %463 = vmatprep.mubr.bf16.mxu0 0
        %464 = vmatmul.mubr.bf16.gmra.mxu0 %v380
        %v465 = vpop.f32.mrf.mxu0
        %v466 = vadd.f32 0.0, %v465
        %v467 = vpop.f32.mrf.mxu0
        %v468 = vpop.f32.mrf.mxu0
        %v469 = vadd.f32 0.0, %v468
        %v470 = vpop.f32.mrf.mxu0
        %471 = vmatprep.mubr.bf16.mxu0 0
        %472 = vmatmul.mubr.bf16.gmra.mxu0 %v383
        %v473 = vpop.f32.mrf.mxu0
        %v474 = vadd.f32 0.0, %v473
        %v475 = vpop.f32.mrf.mxu0
        %v476 = vpop.f32.mrf.mxu0
        %v477 = vadd.f32 0.0, %v476
        %v478 = vpop.f32.mrf.mxu0
        %479 = vmatprep.mubr.bf16.mxu0 0
        %480 = vmatmul.mubr.bf16.gmra.mxu0 %v386
        %v481 = vpop.f32.mrf.mxu0
        %v482 = vadd.f32 0.0, %v481
        %v483 = vpop.f32.mrf.mxu0
        %v484 = vpop.f32.mrf.mxu0
        %v485 = vadd.f32 0.0, %v484
        %v486 = vpop.f32.mrf.mxu0
        %487 = vmatprep.mubr.bf16.mxu0 0
        %488 = vmatmul.mubr.bf16.gmra.mxu0 %v389
        %v489 = vpop.f32.mrf.mxu0
        %v490 = vadd.f32 0.0, %v489
        %v491 = vpop.f32.mrf.mxu0
        %v492 = vpop.f32.mrf.mxu0
        %v493 = vadd.f32 0.0, %v492
        %v494 = vpop.f32.mrf.mxu0
        %495 = vmatprep.mubr.bf16.mxu0 0
        %496 = vmatmul.mubr.bf16.gmra.mxu0 %v392
        %v497 = vpop.f32.mrf.mxu0
        %v498 = vadd.f32 0.0, %v497
        %v499 = vpop.f32.mrf.mxu0
        %v500 = vpop.f32.mrf.mxu0
        %v501 = vadd.f32 0.0, %v500
        %v502 = vpop.f32.mrf.mxu0
        %503 = vmatprep.mubr.bf16.mxu0 0
        %504 = vmatmul.mubr.bf16.gmra.mxu0 %v395
        %v505 = vpop.f32.mrf.mxu0
        %v506 = vadd.f32 0.0, %v505
        %v507 = vpop.f32.mrf.mxu0
        %v508 = vpop.f32.mrf.mxu0
        %v509 = vadd.f32 0.0, %v508
        %v510 = vpop.f32.mrf.mxu0
        %511 = vmatprep.mubr.bf16.mxu0 0
        %512 = vmatmul.mubr.bf16.gmra.mxu0 %v398
        %v513 = vpop.f32.mrf.mxu0
        %v514 = vadd.f32 0.0, %v513
        %v515 = vpop.f32.mrf.mxu0
        %v516 = vpop.f32.mrf.mxu0
        %v517 = vadd.f32 0.0, %v516
        %v518 = vpop.f32.mrf.mxu0
        %519 = vmatprep.mubr.bf16.mxu0 0
        %520 = vmatmul.mubr.bf16.gmra.mxu0 %v401
        %v521 = vpop.f32.mrf.mxu0
        %v522 = vadd.f32 0.0, %v521
        %v523 = vpop.f32.mrf.mxu0
        %v524 = vpop.f32.mrf.mxu0
        %v525 = vadd.f32 0.0, %v524
        %v526 = vpop.f32.mrf.mxu0
        %527 = vmatprep.mubr.bf16.mxu0 0
        %528 = vmatmul.mubr.bf16.gmra.mxu0 %v404
        %v529 = vpop.f32.mrf.mxu0
        %v530 = vadd.f32 0.0, %v529
        %v531 = vpop.f32.mrf.mxu0
        %v532 = vpop.f32.mrf.mxu0
        %v533 = vadd.f32 0.0, %v532
        %v534 = vpop.f32.mrf.mxu0
        %535 = vmatprep.mubr.bf16.mxu0 0
        %536 = vmatmul.mubr.bf16.gmra.mxu0 %v407
        %v537 = vpop.f32.mrf.mxu0
        %v538 = vadd.f32 0.0, %v537
        %v539 = vpop.f32.mrf.mxu0
        %v540 = vpop.f32.mrf.mxu0
        %v541 = vadd.f32 0.0, %v540
        %v542 = vpop.f32.mrf.mxu0
        %543 = vmatprep.mubr.bf16.mxu0 0
        %544 = vmatmul.mubr.bf16.gmra.mxu0 %v410
        %v545 = vpop.f32.mrf.mxu0
        %v546 = vadd.f32 0.0, %v545
        %v547 = vpop.f32.mrf.mxu0
        %v548 = vpop.f32.mrf.mxu0
        %v549 = vadd.f32 0.0, %v548
        %v550 = vpop.f32.mrf.mxu0
        %551 = vmatprep.mubr.bf16.mxu0 0
        %552 = vmatmul.mubr.bf16.gmra.mxu0 %v413
        %v553 = vpop.f32.mrf.mxu0
        %v554 = vadd.f32 0.0, %v553
        %v555 = vpop.f32.mrf.mxu0
        %v556 = vpop.f32.mrf.mxu0
        %v557 = vadd.f32 0.0, %v556
        %v558 = vpop.f32.mrf.mxu0
        %559 = vmatprep.mubr.bf16.mxu0 0
        %560 = vmatmul.mubr.bf16.gmra.mxu0 %v416
        %v561 = vpop.f32.mrf.mxu0
        %v562 = vadd.f32 0.0, %v561
        %v563 = vpop.f32.mrf.mxu0
        %v564 = vpop.f32.mrf.mxu0
        %v565 = vadd.f32 0.0, %v564
        %v566 = vpop.f32.mrf.mxu0
        %567 = vmatprep.mubr.bf16.mxu0 0
        %568 = vmatmul.mubr.bf16.gmra.mxu0 %v419
        %v569 = vpop.f32.mrf.mxu0
        %v570 = vadd.f32 0.0, %v569
        %v571 = vpop.f32.mrf.mxu0
        %v572 = vpop.f32.mrf.mxu0
        %v573 = vadd.f32 0.0, %v572
        %v574 = vpop.f32.mrf.mxu0
        %575 = vmatprep.mubr.bf16.mxu0 0
        %576 = vmatmul.mubr.bf16.gmra.mxu0 %v422
        %v577 = vpop.f32.mrf.mxu0
        %v578 = vadd.f32 0.0, %v577
        %v579 = vpop.f32.mrf.mxu0
        %v580 = vpop.f32.mrf.mxu0
        %v581 = vadd.f32 0.0, %v580
        %v582 = vpop.f32.mrf.mxu0
        %583 = vmatprep.mubr.bf16.mxu0 0
        %584 = vmatmul.mubr.bf16.gmra.mxu0 %v425
        %v585 = vpop.f32.mrf.mxu0
        %v586 = vadd.f32 0.0, %v585
        %v587 = vpop.f32.mrf.mxu0
        %v588 = vpop.f32.mrf.mxu0
        %v589 = vadd.f32 0.0, %v588
        %v590 = vpop.f32.mrf.mxu0
        %591 = vdwg.mxu0
        %v592 = vpack.c.bf16 %v469, %v466
        %v593 = vpack.c.bf16 %v477, %v474
        %v594 = vpack.c.bf16 %v485, %v482
        %v595 = vpack.c.bf16 %v493, %v490
        %v596 = vpack.c.bf16 %v501, %v498
        %v597 = vpack.c.bf16 %v509, %v506
        %v598 = vpack.c.bf16 %v517, %v514
        %v599 = vpack.c.bf16 %v525, %v522
        %v600 = vpack.c.bf16 %v533, %v530
        %v601 = vpack.c.bf16 %v541, %v538
        %v602 = vpack.c.bf16 %v549, %v546
        %v603 = vpack.c.bf16 %v557, %v554
        %v604 = vpack.c.bf16 %v565, %v562
        %v605 = vpack.c.bf16 %v573, %v570
        %v606 = vpack.c.bf16 %v581, %v578
        %v607 = vpack.c.bf16 %v589, %v586
        %v624 = vunpack.c.l.b16 %v592
        %v625 = vunpack.c.h.b16 %v592
        %v626 = vunpack.c.l.b16 %v593
        %v627 = vunpack.c.h.b16 %v593
        %v628 = vunpack.c.l.b16 %v594
        %v629 = vunpack.c.h.b16 %v594
        %v630 = vunpack.c.l.b16 %v595
        %v631 = vunpack.c.h.b16 %v595
        %v632 = vunpack.c.l.b16 %v596
        %v633 = vunpack.c.h.b16 %v596
        %v634 = vunpack.c.l.b16 %v597
        %v635 = vunpack.c.h.b16 %v597
        %v636 = vunpack.c.l.b16 %v598
        %v637 = vunpack.c.h.b16 %v598
        %v638 = vunpack.c.l.b16 %v599
        %v639 = vunpack.c.h.b16 %v599
        %v640 = vunpack.c.l.b16 %v600
        %v641 = vunpack.c.h.b16 %v600
        %v642 = vunpack.c.l.b16 %v601
        %v643 = vunpack.c.h.b16 %v601
        %v644 = vunpack.c.l.b16 %v602
        %v645 = vunpack.c.h.b16 %v602
        %v646 = vunpack.c.l.b16 %v603
        %v647 = vunpack.c.h.b16 %v603
        %v648 = vunpack.c.l.b16 %v604
        %v649 = vunpack.c.h.b16 %v604
        %v650 = vunpack.c.l.b16 %v605
        %v651 = vunpack.c.h.b16 %v605
        %v652 = vunpack.c.l.b16 %v606
        %v653 = vunpack.c.h.b16 %v606
        %v654 = vunpack.c.l.b16 %v607
        %v655 = vunpack.c.h.b16 %v607
        %v656 = vpack.c.b16 %v624, %v624
        %v657 = vpack.c.b16 %v625, %v625
        %v658 = vpack.c.b16 %v626, %v626
        %v659 = vpack.c.b16 %v627, %v627
        %v660 = vpack.c.b16 %v628, %v628
        %v661 = vpack.c.b16 %v629, %v629
        %v662 = vpack.c.b16 %v630, %v630
        %v663 = vpack.c.b16 %v631, %v631
        %v664 = vpack.c.b16 %v632, %v632
        %v665 = vpack.c.b16 %v633, %v633
        %v666 = vpack.c.b16 %v634, %v634
        %v667 = vpack.c.b16 %v635, %v635
        %v668 = vpack.c.b16 %v636, %v636
        %v669 = vpack.c.b16 %v637, %v637
        %v670 = vpack.c.b16 %v638, %v638
        %v671 = vpack.c.b16 %v639, %v639
        %v672 = vpack.c.b16 %v640, %v640
        %v673 = vpack.c.b16 %v641, %v641
        %v674 = vpack.c.b16 %v642, %v642
        %v675 = vpack.c.b16 %v643, %v643
        %v676 = vpack.c.b16 %v644, %v644
        %v677 = vpack.c.b16 %v645, %v645
        %v678 = vpack.c.b16 %v646, %v646
        %v679 = vpack.c.b16 %v647, %v647
        %v680 = vpack.c.b16 %v648, %v648
        %v681 = vpack.c.b16 %v649, %v649
        %v682 = vpack.c.b16 %v650, %v650
        %v683 = vpack.c.b16 %v651, %v651
        %v684 = vpack.c.b16 %v652, %v652
        %v685 = vpack.c.b16 %v653, %v653
        %v686 = vpack.c.b16 %v654, %v654
        %v687 = vpack.c.b16 %v655, %v655
        %720 = vst [vmem:[%s214] sm:$0xf] %v656
        %721 = vst [vmem:[%s214 + $0x4] sm:$0xf] %v657
        %722 = vst [vmem:[%s214 + $0x8] sm:$0xf] %v658
        %723 = vst [vmem:[%s214 + $0xc] sm:$0xf] %v659
        %724 = vst [vmem:[%s214 + $0x10] sm:$0xf] %v660
        %725 = vst [vmem:[%s214 + $0x14] sm:$0xf] %v661
        %726 = vst [vmem:[%s214 + $0x18] sm:$0xf] %v662
        %727 = vst [vmem:[%s214 + $0x1c] sm:$0xf] %v663
        %728 = vst [vmem:[%s214 + $0x20] sm:$0xf] %v664
        %729 = vst [vmem:[%s214 + $0x24] sm:$0xf] %v665
        %730 = vst [vmem:[%s214 + $0x28] sm:$0xf] %v666
        %731 = vst [vmem:[%s214 + $0x2c] sm:$0xf] %v667
        %732 = vst [vmem:[%s214 + $0x30] sm:$0xf] %v668
        %733 = vst [vmem:[%s214 + $0x34] sm:$0xf] %v669
        %734 = vst [vmem:[%s214 + $0x38] sm:$0xf] %v670
        %735 = vst [vmem:[%s214 + $0x3c] sm:$0xf] %v671
        %736 = vst [vmem:[%s214 + $0x40] sm:$0xf] %v672
        %737 = vst [vmem:[%s214 + $0x44] sm:$0xf] %v673
        %738 = vst [vmem:[%s214 + $0x48] sm:$0xf] %v674
        %739 = vst [vmem:[%s214 + $0x4c] sm:$0xf] %v675
        %740 = vst [vmem:[%s214 + $0x50] sm:$0xf] %v676
        %741 = vst [vmem:[%s214 + $0x54] sm:$0xf] %v677
        %742 = vst [vmem:[%s214 + $0x58] sm:$0xf] %v678
        %743 = vst [vmem:[%s214 + $0x5c] sm:$0xf] %v679
        %744 = vst [vmem:[%s214 + $0x60] sm:$0xf] %v680
        %745 = vst [vmem:[%s214 + $0x64] sm:$0xf] %v681
        %746 = vst [vmem:[%s214 + $0x68] sm:$0xf] %v682
        %747 = vst [vmem:[%s214 + $0x6c] sm:$0xf] %v683
        %748 = vst [vmem:[%s214 + $0x70] sm:$0xf] %v684
        %749 = vst [vmem:[%s214 + $0x74] sm:$0xf] %v685
        %750 = vst [vmem:[%s214 + $0x78] sm:$0xf] %v686
        %751 = vst [vmem:[%s214 + $0x7c] sm:$0xf] %v687
        %v752 = vld [vmem:[%s221] sm:$0xff]
        %v753 = vadd.f32 %v466, %v469
        %v754 = vadd.f32 %v753, %v474
        %v755 = vadd.f32 %v754, %v477
        %v756 = vadd.f32 %v755, %v482
        %v757 = vadd.f32 %v756, %v485
        %v758 = vadd.f32 %v757, %v490
        %v759 = vadd.f32 %v758, %v493
        %v760 = vadd.f32 %v759, %v498
        %v761 = vadd.f32 %v760, %v501
        %v762 = vadd.f32 %v761, %v506
        %v763 = vadd.f32 %v762, %v509
        %v764 = vadd.f32 %v763, %v514
        %v765 = vadd.f32 %v764, %v517
        %v766 = vadd.f32 %v765, %v522
        %v767 = vadd.f32 %v766, %v525
        %v768 = vadd.f32 %v767, %v530
        %v769 = vadd.f32 %v768, %v533
        %v770 = vadd.f32 %v769, %v538
        %v771 = vadd.f32 %v770, %v541
        %v772 = vadd.f32 %v771, %v546
        %v773 = vadd.f32 %v772, %v549
        %v774 = vadd.f32 %v773, %v554
        %v775 = vadd.f32 %v774, %v557
        %v776 = vadd.f32 %v775, %v562
        %v777 = vadd.f32 %v776, %v565
        %v778 = vadd.f32 %v777, %v570
        %v779 = vadd.f32 %v778, %v573
        %v780 = vadd.f32 %v779, %v578
        %v781 = vadd.f32 %v780, %v581
        %v782 = vadd.f32 %v781, %v586
        %v783 = vadd.f32 %v782, %v589
        %v784 = vadd.f32 %v752, %v783
        %785 = vst [vmem:[%s221] sm:$0xff] %v784
        %v786 = vld [vmem:[%s228] sm:$0xff]
        %v787 = vmul.f32 %v466, %v466
        %v788 = vmul.f32 %v469, %v469
        %v789 = vmul.f32 %v474, %v474
        %v790 = vmul.f32 %v477, %v477
        %v791 = vmul.f32 %v482, %v482
        %v792 = vmul.f32 %v485, %v485
        %v793 = vmul.f32 %v490, %v490
        %v794 = vmul.f32 %v493, %v493
        %v795 = vmul.f32 %v498, %v498
        %v796 = vmul.f32 %v501, %v501
        %v797 = vmul.f32 %v506, %v506
        %v798 = vmul.f32 %v509, %v509
        %v799 = vmul.f32 %v514, %v514
        %v800 = vmul.f32 %v517, %v517
        %v801 = vmul.f32 %v522, %v522
        %v802 = vmul.f32 %v525, %v525
        %v803 = vmul.f32 %v530, %v530
        %v804 = vmul.f32 %v533, %v533
        %v805 = vmul.f32 %v538, %v538
        %v806 = vmul.f32 %v541, %v541
        %v807 = vmul.f32 %v546, %v546
        %v808 = vmul.f32 %v549, %v549
        %v809 = vmul.f32 %v554, %v554
        %v810 = vmul.f32 %v557, %v557
        %v811 = vmul.f32 %v562, %v562
        %v812 = vmul.f32 %v565, %v565
        %v813 = vmul.f32 %v570, %v570
        %v814 = vmul.f32 %v573, %v573
        %v815 = vmul.f32 %v578, %v578
        %v816 = vmul.f32 %v581, %v581
        %v817 = vmul.f32 %v586, %v586
        %v818 = vmul.f32 %v589, %v589
        %v819 = vadd.f32 %v787, %v788
        %v820 = vadd.f32 %v819, %v789
        %v821 = vadd.f32 %v820, %v790
        %v822 = vadd.f32 %v821, %v791
        %v823 = vadd.f32 %v822, %v792
        %v824 = vadd.f32 %v823, %v793
        %v825 = vadd.f32 %v824, %v794
        %v826 = vadd.f32 %v825, %v795
        %v827 = vadd.f32 %v826, %v796
        %v828 = vadd.f32 %v827, %v797
        %v829 = vadd.f32 %v828, %v798
        %v830 = vadd.f32 %v829, %v799
        %v831 = vadd.f32 %v830, %v800
        %v832 = vadd.f32 %v831, %v801
        %v833 = vadd.f32 %v832, %v802
        %v834 = vadd.f32 %v833, %v803
        %v835 = vadd.f32 %v834, %v804
        %v836 = vadd.f32 %v835, %v805
        %v837 = vadd.f32 %v836, %v806
        %v838 = vadd.f32 %v837, %v807
        %v839 = vadd.f32 %v838, %v808
        %v840 = vadd.f32 %v839, %v809
        %v841 = vadd.f32 %v840, %v810
        %v842 = vadd.f32 %v841, %v811
        %v843 = vadd.f32 %v842, %v812
        %v844 = vadd.f32 %v843, %v813
        %v845 = vadd.f32 %v844, %v814
        %v846 = vadd.f32 %v845, %v815
        %v847 = vadd.f32 %v846, %v816
        %v848 = vadd.f32 %v847, %v817
        %v849 = vadd.f32 %v848, %v818
        %v850 = vadd.f32 %v786, %v849
        %851 = vst [vmem:[%s228] sm:$0xff] %v850
        %s852 = sand.u32 %s93, 1
        %s853 = scalar_lea.sflag [#allocation3], %s852
        %s854 = sand.u32 %s93, 1
        %s855 = smul.addr %s854, 128
        %s856 = scalar_lea.vmem [#allocation2], %s855
        %s857 = sand.u32 %s22, 1
        %s858 = scalar_lea.sflag [#allocation5], %s857
        %s859 = sand.u32 %s119, 1
        %s860 = smul.addr %s859, 8
        %s861 = scalar_lea.vmem [#allocation4], %s860
        %s862 = sand.u32 %s22, 1
        %s863 = scalar_lea.sflag [#allocation5], %s862
        %s864 = sand.u32 %s145, 1
        %s865 = smul.addr %s864, 8
        %s866 = scalar_lea.vmem [#allocation6], %s865
        // Predicated region
        $region33: #{tpu_custom_call.1} parent=27 // pred_check
          %p867 = pneg %p103
        $region34: #{tpu_custom_call.1} parent=27 // pred_check_branch
          %869 = sbr.rel (%p867) target = $region36
        $region35: #{tpu_custom_call.1} parent=27 // pred_region
          %s870 = sadd.s32 %s26, %s27
          %s871 = smul.u32 32, %s870
          %s873 = ssub.s32 2048, 2048
          %874 = vsyncadd %s853, %s873
          %s875 = smul.addr %s871, 64
          %s876 = scalar_lea.hbm %s2, %s875
          %s877 = sshll.u32 %s856, 4
          %s878 = int_to_ptr.vmem [resolvable:$true] %s877
          %883 = dma.vmem_to_hbm [thread:$0]  %s878, 2048, %s876, %s853, 64, 64, 4
        $region36: #{tpu_custom_call.1} parent=27 // pred_fallthru
          _
        // Predicated region
        $region37: #{tpu_custom_call.1} parent=27 // pred_check
          %p884 = pneg %p129
        $region38: #{tpu_custom_call.1} parent=27 // pred_check_branch
          %886 = sbr.rel (%p884) target = $region40
        $region39: #{tpu_custom_call.1} parent=27 // pred_region
          %s888 = ssub.s32 128, 128
          %889 = vsyncadd %s858, %s888
          %s890 = smul.addr %s26, 128
          %s891 = scalar_lea.hbm %s3, %s890
          %s893 = sshll.u32 %s861, 4
          %s894 = int_to_ptr.vmem [resolvable:$true] %s893
          %896 = dma.vmem_to_hbm [thread:$0]  %s894, 128, %s891, %s858
        $region40: #{tpu_custom_call.1} parent=27 // pred_fallthru
          _
        // Predicated region
        $region41: #{tpu_custom_call.1} parent=27 // pred_check
          %p897 = pneg %p155
        $region42: #{tpu_custom_call.1} parent=27 // pred_check_branch
          %899 = sbr.rel (%p897) target = $region44
        $region43: #{tpu_custom_call.1} parent=27 // pred_region
          %s901 = ssub.s32 128, 128
          %902 = vsyncadd %s863, %s901
          %s903 = smul.addr %s26, 128
          %s904 = scalar_lea.hbm %s4, %s903
          %s906 = sshll.u32 %s866, 4
          %s907 = int_to_ptr.vmem [resolvable:$true] %s906
          %909 = dma.vmem_to_hbm [thread:$0]  %s907, 128, %s904, %s863
        $region44: #{tpu_custom_call.1} parent=27 // pred_fallthru
          _
      $region28: #{tpu_custom_call.1} parent=5 // pred_fallthru
        _
      %p910 = scmp.le.s32.totalorder 2, %s17
      // Predicated region
      $region45: #{tpu_custom_call.1} parent=5 // pred_check
        %p911 = pneg %p910
      $region46: #{tpu_custom_call.1} parent=5 // pred_check_branch
        %913 = sbr.rel (%p911) target = $region48
      $region47: #{tpu_custom_call.1} parent=5 // pred_region
        %s914 = ssub.s32 %s17, 2
        // Predicated region
        $region49: #{tpu_custom_call.1} parent=47 // pred_check
          %p915 = pneg %p109
        $region50: #{tpu_custom_call.1} parent=47 // pred_check_branch
          %917 = sbr.rel (%p915) target = $region52
        $region51: #{tpu_custom_call.1} parent=47 // pred_region
          %s918 = sand.u32 %s94, 1
          %s919 = scalar_lea.sflag [#allocation3], %s918
          %s920 = sand.u32 %s94, 1
          %s921 = smul.addr %s920, 128
          %s922 = scalar_lea.vmem [#allocation2], %s921
          %923 = dma.done %s919, 2048
        $region52: #{tpu_custom_call.1} parent=47 // pred_fallthru
          _
        // Predicated region
        $region53: #{tpu_custom_call.1} parent=47 // pred_check
          %p924 = pneg %p135
        $region54: #{tpu_custom_call.1} parent=47 // pred_check_branch
          %926 = sbr.rel (%p924) target = $region56
        $region55: #{tpu_custom_call.1} parent=47 // pred_region
          %s927 = sand.u32 %s23, 1
          %s928 = scalar_lea.sflag [#allocation5], %s927
          %s929 = sand.u32 %s120, 1
          %s930 = smul.addr %s929, 8
          %s931 = scalar_lea.vmem [#allocation4], %s930
          %932 = dma.done %s928, 128
        $region56: #{tpu_custom_call.1} parent=47 // pred_fallthru
          _
        // Predicated region
        $region57: #{tpu_custom_call.1} parent=47 // pred_check
          %p933 = pneg %p161
        $region58: #{tpu_custom_call.1} parent=47 // pred_check_branch
          %935 = sbr.rel (%p933) target = $region60
        $region59: #{tpu_custom_call.1} parent=47 // pred_region
          %s936 = sand.u32 %s23, 1
          %s937 = scalar_lea.sflag [#allocation5], %s936
          %s938 = sand.u32 %s146, 1
          %s939 = smul.addr %s938, 8
          %s940 = scalar_lea.vmem [#allocation6], %s939
          %941 = dma.done %s937, 128
        $region60: #{tpu_custom_call.1} parent=47 // pred_fallthru
          _
      $region48: #{tpu_custom_call.1} parent=5 // pred_fallthru
        _
    $region6: #{tpu_custom_call.1} parent=1 // loop_footer
      %s21 = sadd.s32 1, %s17
    $region7: #{tpu_custom_call.1} parent=1 // loop_footer_branch
      %16 = sbr.rel target = $region3
    $region8: #{tpu_custom_call.1} parent=1 // loop_exit
      _
    %942 = vsyncpa [#allocation3], 1
    %s943 = scalar_lea.sflag [#allocation3], 1
    %944 = vsyncpa %s943, 1
    %945 = vsyncpa [#allocation5], 1
    %s946 = scalar_lea.sflag [#allocation5], 1
    %947 = vsyncpa %s946, 1

</llo_original>
